<compile_context>
chip_gen: v6e
topology: v6e:2x2x1
jax: 0.10.0
libtpu: 0.0.40
codegen_flags: <defaults>
</compile_context>

<pallas_src>
import jax
import jax.numpy as jnp
from jax.experimental import pallas as pl
from jax.experimental.pallas import tpu as pltpu

LANE = 128


def _round_up(n, m):
    return (n + m - 1) // m * m


def _sigmoid(x):
    # logistic via tanh: one EUP op + cheap VPU mul/add (vs exp + reciprocal).
    return 0.5 * jnp.tanh(0.5 * x) + 0.5


# -----------------------------------------------------------------------------
# Shared in-kernel compute. Padded widths: PH = roundup(H,128), PL =
# roundup(L,128), PD = roundup(D,128). Every gate/head block sits in its own
# 128-lane tile; all weight/bias padding is zero, so pad lanes of every
# intermediate are exactly zero.
# -----------------------------------------------------------------------------
def _vae_core(x_ref, eps_ref, w_enc_ref, b_enc_ref, w_head_ref, b_head_ref,
              w_dec_ref, b_dec_ref, eps_buf):
    PH = w_head_ref.shape[0]
    PL = w_head_ref.shape[1] // 2
    PD = w_dec_ref.shape[1] // 3
    L = eps_ref.shape[1]

    # ---- encoder LSTM cell (seq_len == 1, h0 = c0 = 0, forget gate dead) ----
    xb = x_ref[...].astype(jnp.bfloat16)          # cast in-kernel, free under DMA
    g = jnp.dot(xb, w_enc_ref[...],
                preferred_element_type=jnp.float32) + b_enc_ref[...]
    i_g = _sigmoid(g[:, 0 * PH:1 * PH])
    g_g = jnp.tanh(g[:, 1 * PH:2 * PH])
    o_g = _sigmoid(g[:, 2 * PH:3 * PH])
    h_enc = o_g * jnp.tanh(i_g * g_g)             # (tb, PH) f32, pad lanes == 0

    # ---- fused fc_mu | fc_logvar head (kept in f32 for mu/logvar accuracy) --
    head = jnp.dot(h_enc, w_head_ref[...],
                   preferred_element_type=jnp.float32) + b_head_ref[...]
    mu = head[:, 0 * PL:1 * PL]
    logvar = head[:, 1 * PL:2 * PL]

    # ---- reparameterization: widen the un-padded eps inside VMEM ----
    eps_buf[...] = jnp.zeros_like(eps_buf)
    eps_buf[:, :L] = eps_ref[...]
    z = mu + eps_buf[...] * jnp.exp(0.5 * logvar)  # pad lanes stay exactly 0

    # ---- decoder: decoder_l1 folded into the decoder-LSTM input matmul ----
    g2 = jnp.dot(z.astype(jnp.bfloat16), w_dec_ref[...],
                 preferred_element_type=jnp.float32) + b_dec_ref[...]
    i2 = _sigmoid(g2[:, 0 * PD:1 * PD])
    gg2 = jnp.tanh(g2[:, 1 * PD:2 * PD])
    o2 = _sigmoid(g2[:, 2 * PD:3 * PD])
    rec = o2 * jnp.tanh(i2 * gg2)                  # (tb, PD) f32, pad lanes == 0
    return rec, head


def _vae_kernel_packed(x_ref, eps_ref, w_enc_ref, b_enc_ref, w_head_ref,
                       b_head_ref, w_dec_ref, b_dec_ref, s_ref,
                       out_ref, eps_buf):
    rec, head = _vae_core(x_ref, eps_ref, w_enc_ref, b_enc_ref, w_head_ref,
                          b_head_ref, w_dec_ref, b_dec_ref, eps_buf)
    # Exact {0,1} f32 selection matmul scatters mu -> lanes [D, D+L) and
    # logvar -> lanes [D+L, D+2L); rec occupies lanes [0, D) and is exactly
    # zero elsewhere, so a plain add packs all three outputs lane-densely.
    out_ref[...] = rec + jnp.dot(head, s_ref[...],
                                 preferred_element_type=jnp.float32)


def _vae_kernel_split(x_ref, eps_ref, w_enc_ref, b_enc_ref, w_head_ref,
                      b_head_ref, w_dec_ref, b_dec_ref,
                      rec_ref, mu_ref, lv_ref, eps_buf):
    rec, head = _vae_core(x_ref, eps_ref, w_enc_ref, b_enc_ref, w_head_ref,
                          b_head_ref, w_dec_ref, b_dec_ref, eps_buf)
    PL = mu_ref.shape[1]
    rec_ref[...] = rec
    mu_ref[...] = head[:, :PL]
    lv_ref[...] = head[:, PL:]


# -----------------------------------------------------------------------------
# Weight packing: drop dead forget gate, fuse decoder_l1 into the decoder
# matmul, fuse mu|logvar heads, pad every gate/head to its own 128-lane tile
# (zero padding), build the f32 output-packing selection matrix.
# -----------------------------------------------------------------------------
def pack_params(p, input_dim, hidden_dim, latent_dim):
    D, H, L = input_dim, hidden_dim, latent_dim
    PH, PL, PD = _round_up(H, LANE), _round_up(L, LANE), _round_up(D, LANE)

    def pad_to(a, rows, cols):
        return jnp.pad(a, ((0, rows - a.shape[0]), (0, cols - a.shape[1])))

    # encoder LSTM: keep gates i (0), g (2), o (3); drop dead forget gate (1).
    w, b = p["w_ih_enc"], p["b_enc"]                     # (D, 4H), (1, 4H)
    enc_w = jnp.concatenate(
        [pad_to(w[:, k * H:(k + 1) * H], D, PH) for k in (0, 2, 3)], axis=1)
    enc_b = jnp.concatenate(
        [pad_to(b[:, k * H:(k + 1) * H], 1, PH) for k in (0, 2, 3)], axis=1)

    # fused mu | logvar head, each in its own PL-wide tile (kept f32).
    head_w = jnp.concatenate(
        [pad_to(p["w_mu"], PH, PL), pad_to(p["w_lv"], PH, PL)], axis=1)
    head_b = jnp.concatenate(
        [pad_to(p["b_mu"], 1, PL), pad_to(p["b_lv"], 1, PL)], axis=1)

    # decoder: fold decoder_l1 into the LSTM input matmul, drop forget gate.
    wd1, bd1 = p["w_d1"], p["b_d1"]                      # (L, H), (1, H)
    wih, bdd = p["w_ih_dec"], p["b_dec"]                 # (H, 4D), (1, 4D)
    dec_w_blocks, dec_b_blocks = [], []
    for k in (0, 2, 3):
        wg = wih[:, k * D:(k + 1) * D]                   # (H, D)
        dec_w_blocks.append(pad_to(wd1 @ wg, PL, PD))
        dec_b_blocks.append(pad_to(bd1 @ wg + bdd[:, k * D:(k + 1) * D], 1, PD))
    dec_w = jnp.concatenate(dec_w_blocks, axis=1)
    dec_b = jnp.concatenate(dec_b_blocks, axis=1)

    packed_out = (D + 2 * L) <= LANE
    s_mat = None
    if packed_out:
        # head (tb, 2*PL) @ s -> (tb, 128): mu to lanes [D, D+L),
        # logvar to lanes [D+L, D+2L). Entries are exact {0,1} f32.
        s = jnp.zeros((2 * PL, LANE), jnp.float32)
        s = s.at[jnp.arange(L), D + jnp.arange(L)].set(1.0)
        s = s.at[PL + jnp.arange(L), D + L + jnp.arange(L)].set(1.0)
        s_mat = s

    bf16, f32 = jnp.bfloat16, jnp.float32
    return {
        "enc_w": enc_w.astype(bf16), "enc_b": enc_b.astype(f32),
        "head_w": head_w.astype(f32), "head_b": head_b.astype(f32),
        "dec_w": dec_w.astype(bf16), "dec_b": dec_b.astype(f32),
        "s": s_mat, "packed_out": packed_out,
        "PH": PH, "PL": PL, "PD": PD,
    }


# -----------------------------------------------------------------------------
# Wrapper: 1-D batch grid (parallel), weights resident across grid steps,
# lane-dense packed output (or padded triple fallback) sliced back to logical
# shapes.
# -----------------------------------------------------------------------------
def vae_forward(x, eps, params, *, tb_max=512):
    B, D = x.shape
    H, L = params["w_mu"].shape
    pk = pack_params(params, D, H, L)
    PL, PD = pk["PL"], pk["PD"]

    # Batch tiling: multiples of 16 (bf16 sublane packing). Larger batches get
    # at least 2 grid steps so "parallel" can shard across v7x's two
    # TensorCores; tiny batches stay a single step (v5e/v6e single-TC).
    B16 = _round_up(max(B, 1), 16)
    tb = max(16, min(tb_max, _round_up(pl.cdiv(B16, 2), 16)))
    Bp = _round_up(B16, tb)
    grid = (Bp // tb,)

    # x stays f32 (cast to bf16 in-kernel); eps stays un-padded in lanes.
    x_p = jnp.pad(x, ((0, Bp - B), (0, 0)))
    eps_p = jnp.pad(eps, ((0, Bp - B), (0, 0))).astype(jnp.float32)

    def batch_spec(cols):
        return pl.BlockSpec((tb, cols), lambda i: (i, 0))

    def resident_spec(arr):
        # constant index_map -> fetched once, resident across all grid steps
        return pl.BlockSpec(arr.shape, lambda i: (0, 0))

    in_specs = [
        batch_spec(D),                 # x   (f32, original lane width)
        batch_spec(L),                 # eps (f32, un-padded)
        resident_spec(pk["enc_w"]), resident_spec(pk["enc_b"]),
        resident_spec(pk["head_w"]), resident_spec(pk["head_b"]),
        resident_spec(pk["dec_w"]), resident_spec(pk["dec_b"]),
    ]
    inputs = [x_p, eps_p, pk["enc_w"], pk["enc_b"], pk["head_w"], pk["head_b"],
              pk["dec_w"], pk["dec_b"]]
    scratch = [pltpu.VMEM((tb, PL), jnp.float32)]      # eps widening buffer
    cparams = pltpu.CompilerParams(dimension_semantics=("parallel",))

    if pk["packed_out"]:
        in_specs.append(resident_spec(pk["s"]))
        inputs.append(pk["s"])
        out = pl.pallas_call(
            _vae_kernel_packed,
            grid=grid,
            in_specs=in_specs,
            out_specs=batch_spec(LANE),
            out_shape=jax.ShapeDtypeStruct((Bp, LANE), jnp.float32),
            scratch_shapes=scratch,
            compiler_params=cparams,
        )(*inputs)
        rec = out[:B, 0:D]
        mu = out[:B, D:D + L]
        lv = out[:B, D + L:D + 2 * L]
        return rec, mu, lv

    # Fallback for D + 2L > 128: three separate padded f32 outputs.
    rec_p, mu_p, lv_p = pl.pallas_call(
        _vae_kernel_split,
        grid=grid,
        in_specs=in_specs,
        out_specs=(batch_spec(PD), batch_spec(PL), batch_spec(PL)),
        out_shape=(jax.ShapeDtypeStruct((Bp, PD), jnp.float32),
                   jax.ShapeDtypeStruct((Bp, PL), jnp.float32),
                   jax.ShapeDtypeStruct((Bp, PL), jnp.float32)),
        scratch_shapes=scratch,
        compiler_params=cparams,
    )(*inputs)
    return rec_p[:B, :D], mu_p[:B, :L], lv_p[:B, :L]


# -----------------------------------------------------------------------------
# Deterministic parameter init (shapes follow the nn.Module __init__; weights
# stored pre-transposed for (in, out) matmuls, LSTM biases b_ih + b_hh folded).
# -----------------------------------------------------------------------------
def init_params(key, input_dim, hidden_dim, latent_dim):
    ks = jax.random.split(key, 12)

    def u(k, shape, fan_in):
        bound = 1.0 / jnp.sqrt(jnp.float32(fan_in))
        return jax.random.uniform(k, shape, jnp.float32, -bound, bound)

    return {
        # encoder LSTM (nn.LSTM(input_dim, hidden_dim)): W_ih (4H, D) -> (D, 4H)
        "w_ih_enc": u(ks[0], (input_dim, 4 * hidden_dim), hidden_dim),
        "b_enc":    u(ks[1], (1, 4 * hidden_dim), hidden_dim)
                  + u(ks[2], (1, 4 * hidden_dim), hidden_dim),
        # encoder_fc_mu / logvar (nn.Linear(H, L)): W (L, H) -> (H, L)
        "w_mu": u(ks[3], (hidden_dim, latent_dim), hidden_dim),
        "b_mu": u(ks[4], (1, latent_dim), hidden_dim),
        "w_lv": u(ks[5], (hidden_dim, latent_dim), hidden_dim),
        "b_lv": u(ks[6], (1, latent_dim), hidden_dim),
        # decoder_l1 (nn.Linear(L, H)): W (H, L) -> (L, H)
        "w_d1": u(ks[7], (latent_dim, hidden_dim), latent_dim),
        "b_d1": u(ks[8], (1, hidden_dim), latent_dim),
        # decoder LSTM (nn.LSTM(hidden_dim, input_dim)): W_ih (4D, H) -> (H, 4D)
        "w_ih_dec": u(ks[9], (hidden_dim, 4 * input_dim), input_dim),
        "b_dec":    u(ks[10], (1, 4 * input_dim), input_dim)
                  + u(ks[11], (1, 4 * input_dim), input_dim),
    }


# -----------------------------------------------------------------------------
# Pure-JAX f32 reference (exact module math, 4 gates) for correctness checks.
# -----------------------------------------------------------------------------
def vae_forward_ref(x, eps, p):
    H = p["w_mu"].shape[0]
    D = x.shape[1]
    g = x @ p["w_ih_enc"] + p["b_enc"]
    i = jax.nn.sigmoid(g[:, 0 * H:1 * H])
    f = jax.nn.sigmoid(g[:, 1 * H:2 * H])
    gg = jnp.tanh(g[:, 2 * H:3 * H])
    o = jax.nn.sigmoid(g[:, 3 * H:4 * H])
    h = o * jnp.tanh(i * gg + f * 0.0)
    mu = h @ p["w_mu"] + p["b_mu"]
    lv = h @ p["w_lv"] + p["b_lv"]
    z = mu + eps * jnp.exp(0.5 * lv)
    d = z @ p["w_d1"] + p["b_d1"]
    g2 = d @ p["w_ih_dec"] + p["b_dec"]
    i2 = jax.nn.sigmoid(g2[:, 0 * D:1 * D])
    f2 = jax.nn.sigmoid(g2[:, 1 * D:2 * D])
    gg2 = jnp.tanh(g2[:, 2 * D:3 * D])
    o2 = jax.nn.sigmoid(g2[:, 3 * D:4 * D])
    rec = o2 * jnp.tanh(i2 * gg2 + f2 * 0.0)
    return rec, mu, lv


if __name__ == "__main__":
    B, INPUT_DIM, HIDDEN_DIM, LATENT_DIM = 8, 16, 32, 8

    key = jax.random.PRNGKey(0)
    k_x, k_eps, k_p, k_x2, k_eps2 = jax.random.split(key, 5)

    params = init_params(k_p, INPUT_DIM, HIDDEN_DIM, LATENT_DIM)

    x = jax.random.normal(k_x, (B, INPUT_DIM), jnp.float32)
    # eps replaces torch.randn_like inside sample_z (passed in for determinism)
    eps = jax.random.normal(k_eps, (B, LATENT_DIM), jnp.float32)

    recon, mu, logvar = vae_forward(x, eps, params)
    jax.block_until_ready((recon, mu, logvar))

    r_ref, m_ref, l_ref = vae_forward_ref(x, eps, params)
    assert recon.shape == (B, INPUT_DIM)
    assert mu.shape == (B, LATENT_DIM) and logvar.shape == (B, LATENT_DIM)
    # bf16 matmul operands (f32 accumulate) -> bf16-level tolerance
    assert jnp.allclose(recon, r_ref, atol=2e-2)
    assert jnp.allclose(mu, m_ref, atol=2e-2)
    assert jnp.allclose(logvar, l_ref, atol=2e-2)

    # second check: ragged batch + multi-step grid (tile 16 -> 3 grid steps)
    B2 = 40
    x2 = jax.random.normal(k_x2, (B2, INPUT_DIM), jnp.float32)
    eps2 = jax.random.normal(k_eps2, (B2, LATENT_DIM), jnp.float32)
    r2, m2, l2 = vae_forward(x2, eps2, params, tb_max=16)
    jax.block_until_ready((r2, m2, l2))
    rr, mr, lr = vae_forward_ref(x2, eps2, params)
    assert jnp.allclose(r2, rr, atol=2e-2)
    assert jnp.allclose(m2, mr, atol=2e-2)
    assert jnp.allclose(l2, lr, atol=2e-2)

    print("KERNEL_OK")
</pallas_src>

<mosaic_0001>
module attributes {stable_mosaic.version = 11 : i64} {
  func.func @_vae_kernel_packed(%arg0: i32, %arg1: memref<16x16xf32, #tpu.memory_space<vmem>>, %arg2: memref<16x8xf32, #tpu.memory_space<vmem>>, %arg3: memref<16x384xbf16, #tpu.memory_space<vmem>>, %arg4: memref<1x384xf32, #tpu.memory_space<vmem>>, %arg5: memref<128x256xf32, #tpu.memory_space<vmem>>, %arg6: memref<1x256xf32, #tpu.memory_space<vmem>>, %arg7: memref<128x384xbf16, #tpu.memory_space<vmem>>, %arg8: memref<1x384xf32, #tpu.memory_space<vmem>>, %arg9: memref<256x128xf32, #tpu.memory_space<vmem>>, %arg10: memref<16x128xf32, #tpu.memory_space<vmem>>, %arg11: memref<16x128xf32, #tpu.memory_space<vmem>>) attributes {dimension_semantics = [#tpu.dimension_semantics<parallel>], iteration_bounds = array<i64: 1>, scalar_prefetch = 0 : i64, scratch_operands = 1 : i64, tpu.core_type = #tpu.core_type<tc>, window_params = [{transform_indices = @transform_0, window_bounds = array<i64: 16, 16>}, {transform_indices = @transform_1, window_bounds = array<i64: 16, 8>}, {pipeline_mode = #tpu.pipeline_mode<synchronous>, transform_indices = @transform_2, window_bounds = array<i64: 16, 384>}, {pipeline_mode = #tpu.pipeline_mode<synchronous>, transform_indices = @transform_3, window_bounds = array<i64: 1, 384>}, {pipeline_mode = #tpu.pipeline_mode<synchronous>, transform_indices = @transform_4, window_bounds = array<i64: 128, 256>}, {pipeline_mode = #tpu.pipeline_mode<synchronous>, transform_indices = @transform_5, window_bounds = array<i64: 1, 256>}, {pipeline_mode = #tpu.pipeline_mode<synchronous>, transform_indices = @transform_6, window_bounds = array<i64: 128, 384>}, {pipeline_mode = #tpu.pipeline_mode<synchronous>, transform_indices = @transform_7, window_bounds = array<i64: 1, 384>}, {pipeline_mode = #tpu.pipeline_mode<synchronous>, transform_indices = @transform_8, window_bounds = array<i64: 256, 128>}, {transform_indices = @transform_9, window_bounds = array<i64: 16, 128>}]} {
    %c0 = arith.constant 0 : index
    %c0_0 = arith.constant 0 : index
    %0 = vector.load %arg1[%c0, %c0_0] : memref<16x16xf32, #tpu.memory_space<vmem>>, vector<16x16xf32>
    %1 = arith.truncf %0 : vector<16x16xf32> to vector<16x16xbf16>
    %c0_1 = arith.constant 0 : index
    %c0_2 = arith.constant 0 : index
    %2 = vector.load %arg3[%c0_1, %c0_2] : memref<16x384xbf16, #tpu.memory_space<vmem>>, vector<16x384xbf16>
    %cst = arith.constant dense<0.000000e+00> : vector<16x384xf32>
    %3 = tpu.matmul %1, %2, %cst {dimension_numbers = #tpu.dot_dimension_numbers<[1], [0], [0], [1], [0, 0, 1, 1], [], []>} : vector<16x16xbf16>, vector<16x384xbf16>, vector<16x384xf32> -> vector<16x384xf32>
    %c0_3 = arith.constant 0 : index
    %c0_4 = arith.constant 0 : index
    %4 = vector.load %arg4[%c0_3, %c0_4] : memref<1x384xf32, #tpu.memory_space<vmem>>, vector<1x384xf32>
    %5 = vector.broadcast %4 : vector<1x384xf32> to vector<16x384xf32>
    %6 = arith.addf %3, %5 : vector<16x384xf32>
    %7 = vector.extract_strided_slice %6 {offsets = [0, 0], sizes = [16, 128], strides = [1, 1]} : vector<16x384xf32> to vector<16x128xf32>
    %cst_5 = arith.constant 5.000000e-01 : f32
    %8 = vector.broadcast %cst_5 : f32 to vector<16x128xf32>
    %9 = arith.mulf %8, %7 : vector<16x128xf32>
    %10 = math.tanh %9 : vector<16x128xf32>
    %cst_6 = arith.constant 5.000000e-01 : f32
    %11 = vector.broadcast %cst_6 : f32 to vector<16x128xf32>
    %12 = arith.mulf %11, %10 : vector<16x128xf32>
    %cst_7 = arith.constant 5.000000e-01 : f32
    %13 = vector.broadcast %cst_7 : f32 to vector<16x128xf32>
    %14 = arith.addf %12, %13 : vector<16x128xf32>
    %15 = vector.extract_strided_slice %6 {offsets = [0, 128], sizes = [16, 128], strides = [1, 1]} : vector<16x384xf32> to vector<16x128xf32>
    %16 = math.tanh %15 : vector<16x128xf32>
    %17 = vector.extract_strided_slice %6 {offsets = [0, 256], sizes = [16, 128], strides = [1, 1]} : vector<16x384xf32> to vector<16x128xf32>
    %cst_8 = arith.constant 5.000000e-01 : f32
    %18 = vector.broadcast %cst_8 : f32 to vector<16x128xf32>
    %19 = arith.mulf %18, %17 : vector<16x128xf32>
    %20 = math.tanh %19 : vector<16x128xf32>
    %cst_9 = arith.constant 5.000000e-01 : f32
    %21 = vector.broadcast %cst_9 : f32 to vector<16x128xf32>
    %22 = arith.mulf %21, %20 : vector<16x128xf32>
    %cst_10 = arith.constant 5.000000e-01 : f32
    %23 = vector.broadcast %cst_10 : f32 to vector<16x128xf32>
    %24 = arith.addf %22, %23 : vector<16x128xf32>
    %25 = arith.mulf %14, %16 : vector<16x128xf32>
    %26 = math.tanh %25 : vector<16x128xf32>
    %27 = arith.mulf %24, %26 : vector<16x128xf32>
    %c0_11 = arith.constant 0 : index
    %c0_12 = arith.constant 0 : index
    %28 = vector.load %arg5[%c0_11, %c0_12] : memref<128x256xf32, #tpu.memory_space<vmem>>, vector<128x256xf32>
    %cst_13 = arith.constant dense<0.000000e+00> : vector<16x256xf32>
    %29 = tpu.matmul %27, %28, %cst_13 {dimension_numbers = #tpu.dot_dimension_numbers<[1], [0], [0], [1], [0, 0, 1, 1], [], []>} : vector<16x128xf32>, vector<128x256xf32>, vector<16x256xf32> -> vector<16x256xf32>
    %c0_14 = arith.constant 0 : index
    %c0_15 = arith.constant 0 : index
    %30 = vector.load %arg6[%c0_14, %c0_15] : memref<1x256xf32, #tpu.memory_space<vmem>>, vector<1x256xf32>
    %31 = vector.broadcast %30 : vector<1x256xf32> to vector<16x256xf32>
    %32 = arith.addf %29, %31 : vector<16x256xf32>
    %33 = vector.extract_strided_slice %32 {offsets = [0, 0], sizes = [16, 128], strides = [1, 1]} : vector<16x256xf32> to vector<16x128xf32>
    %34 = vector.extract_strided_slice %32 {offsets = [0, 128], sizes = [16, 128], strides = [1, 1]} : vector<16x256xf32> to vector<16x128xf32>
    %cst_16 = arith.constant 0.000000e+00 : f32
    %35 = vector.broadcast %cst_16 : f32 to vector<16x128xf32>
    %c0_17 = arith.constant 0 : index
    %c0_18 = arith.constant 0 : index
    %36 = vector.load %arg11[%c0_17, %c0_18] : memref<16x128xf32, #tpu.memory_space<vmem>>, vector<16x128xf32>
    tpu.vector_store %arg11[%c0_17, %c0_18], %35 {strides = array<i32>} : memref<16x128xf32, #tpu.memory_space<vmem>>, vector<16x128xf32>,
    %c0_19 = arith.constant 0 : index
    %c0_20 = arith.constant 0 : index
    %37 = vector.load %arg2[%c0_19, %c0_20] : memref<16x8xf32, #tpu.memory_space<vmem>>, vector<16x8xf32>
    %c0_21 = arith.constant 0 : index
    %c0_22 = arith.constant 0 : index
    %38 = vector.load %arg11[%c0_21, %c0_22] : memref<16x128xf32, #tpu.memory_space<vmem>>, vector<16x8xf32>
    tpu.vector_store %arg11[%c0_21, %c0_22], %37 {strides = array<i32>} : memref<16x128xf32, #tpu.memory_space<vmem>>, vector<16x8xf32>,
    %c0_23 = arith.constant 0 : index
    %c0_24 = arith.constant 0 : index
    %39 = vector.load %arg11[%c0_23, %c0_24] : memref<16x128xf32, #tpu.memory_space<vmem>>, vector<16x128xf32>
    %cst_25 = arith.constant 5.000000e-01 : f32
    %40 = vector.broadcast %cst_25 : f32 to vector<16x128xf32>
    %41 = arith.mulf %40, %34 : vector<16x128xf32>
    %42 = math.exp %41 : vector<16x128xf32>
    %43 = arith.mulf %39, %42 : vector<16x128xf32>
    %44 = arith.addf %33, %43 : vector<16x128xf32>
    %45 = arith.truncf %44 : vector<16x128xf32> to vector<16x128xbf16>
    %c0_26 = arith.constant 0 : index
    %c0_27 = arith.constant 0 : index
    %46 = vector.load %arg7[%c0_26, %c0_27] : memref<128x384xbf16, #tpu.memory_space<vmem>>, vector<128x384xbf16>
    %cst_28 = arith.constant dense<0.000000e+00> : vector<16x384xf32>
    %47 = tpu.matmul %45, %46, %cst_28 {dimension_numbers = #tpu.dot_dimension_numbers<[1], [0], [0], [1], [0, 0, 1, 1], [], []>} : vector<16x128xbf16>, vector<128x384xbf16>, vector<16x384xf32> -> vector<16x384xf32>
    %c0_29 = arith.constant 0 : index
    %c0_30 = arith.constant 0 : index
    %48 = vector.load %arg8[%c0_29, %c0_30] : memref<1x384xf32, #tpu.memory_space<vmem>>, vector<1x384xf32>
    %49 = vector.broadcast %48 : vector<1x384xf32> to vector<16x384xf32>
    %50 = arith.addf %47, %49 : vector<16x384xf32>
    %51 = vector.extract_strided_slice %50 {offsets = [0, 0], sizes = [16, 128], strides = [1, 1]} : vector<16x384xf32> to vector<16x128xf32>
    %cst_31 = arith.constant 5.000000e-01 : f32
    %52 = vector.broadcast %cst_31 : f32 to vector<16x128xf32>
    %53 = arith.mulf %52, %51 : vector<16x128xf32>
    %54 = math.tanh %53 : vector<16x128xf32>
    %cst_32 = arith.constant 5.000000e-01 : f32
    %55 = vector.broadcast %cst_32 : f32 to vector<16x128xf32>
    %56 = arith.mulf %55, %54 : vector<16x128xf32>
    %cst_33 = arith.constant 5.000000e-01 : f32
    %57 = vector.broadcast %cst_33 : f32 to vector<16x128xf32>
    %58 = arith.addf %56, %57 : vector<16x128xf32>
    %59 = vector.extract_strided_slice %50 {offsets = [0, 128], sizes = [16, 128], strides = [1, 1]} : vector<16x384xf32> to vector<16x128xf32>
    %60 = math.tanh %59 : vector<16x128xf32>
    %61 = vector.extract_strided_slice %50 {offsets = [0, 256], sizes = [16, 128], strides = [1, 1]} : vector<16x384xf32> to vector<16x128xf32>
    %cst_34 = arith.constant 5.000000e-01 : f32
    %62 = vector.broadcast %cst_34 : f32 to vector<16x128xf32>
    %63 = arith.mulf %62, %61 : vector<16x128xf32>
    %64 = math.tanh %63 : vector<16x128xf32>
    %cst_35 = arith.constant 5.000000e-01 : f32
    %65 = vector.broadcast %cst_35 : f32 to vector<16x128xf32>
    %66 = arith.mulf %65, %64 : vector<16x128xf32>
    %cst_36 = arith.constant 5.000000e-01 : f32
    %67 = vector.broadcast %cst_36 : f32 to vector<16x128xf32>
    %68 = arith.addf %66, %67 : vector<16x128xf32>
    %69 = arith.mulf %58, %60 : vector<16x128xf32>
    %70 = math.tanh %69 : vector<16x128xf32>
    %71 = arith.mulf %68, %70 : vector<16x128xf32>
    %c0_37 = arith.constant 0 : index
    %c0_38 = arith.constant 0 : index
    %72 = vector.load %arg9[%c0_37, %c0_38] : memref<256x128xf32, #tpu.memory_space<vmem>>, vector<256x128xf32>
    %cst_39 = arith.constant dense<0.000000e+00> : vector<16x128xf32>
    %73 = tpu.matmul %32, %72, %cst_39 {dimension_numbers = #tpu.dot_dimension_numbers<[1], [0], [0], [1], [0, 0, 1, 1], [], []>} : vector<16x256xf32>, vector<256x128xf32>, vector<16x128xf32> -> vector<16x128xf32>
    %74 = arith.addf %71, %73 : vector<16x128xf32>
    %c0_40 = arith.constant 0 : index
    %c0_41 = arith.constant 0 : index
    %75 = vector.load %arg10[%c0_40, %c0_41] : memref<16x128xf32, #tpu.memory_space<vmem>>, vector<16x128xf32>
    tpu.vector_store %arg10[%c0_40, %c0_41], %74 {strides = array<i32>} : memref<16x128xf32, #tpu.memory_space<vmem>>, vector<16x128xf32>,
    return
  }
  func.func @transform_0(%arg0: i32) -> (i32, i32) {
    %c0_i32 = arith.constant 0 : i32
    %c0_i32_0 = arith.constant 0 : i32
    return %arg0, %c0_i32 : i32, i32
  }
  func.func @transform_1(%arg0: i32) -> (i32, i32) {
    %c0_i32 = arith.constant 0 : i32
    %c0_i32_0 = arith.constant 0 : i32
    return %arg0, %c0_i32 : i32, i32
  }
  func.func @transform_2(%arg0: i32) -> (i32, i32) {
    %c0_i32 = arith.constant 0 : i32
    %c0_i32_0 = arith.constant 0 : i32
    %c0_i32_1 = arith.constant 0 : i32
    return %c0_i32, %c0_i32_0 : i32, i32
  }
  func.func @transform_3(%arg0: i32) -> (i32, i32) {
    %c0_i32 = arith.constant 0 : i32
    %c0_i32_0 = arith.constant 0 : i32
    %c0_i32_1 = arith.constant 0 : i32
    return %c0_i32, %c0_i32_0 : i32, i32
  }
  func.func @transform_4(%arg0: i32) -> (i32, i32) {
    %c0_i32 = arith.constant 0 : i32
    %c0_i32_0 = arith.constant 0 : i32
    %c0_i32_1 = arith.constant 0 : i32
    return %c0_i32, %c0_i32_0 : i32, i32
  }
  func.func @transform_5(%arg0: i32) -> (i32, i32) {
    %c0_i32 = arith.constant 0 : i32
    %c0_i32_0 = arith.constant 0 : i32
    %c0_i32_1 = arith.constant 0 : i32
    return %c0_i32, %c0_i32_0 : i32, i32
  }
  func.func @transform_6(%arg0: i32) -> (i32, i32) {
    %c0_i32 = arith.constant 0 : i32
    %c0_i32_0 = arith.constant 0 : i32
    %c0_i32_1 = arith.constant 0 : i32
    return %c0_i32, %c0_i32_0 : i32, i32
  }
  func.func @transform_7(%arg0: i32) -> (i32, i32) {
    %c0_i32 = arith.constant 0 : i32
    %c0_i32_0 = arith.constant 0 : i32
    %c0_i32_1 = arith.constant 0 : i32
    return %c0_i32, %c0_i32_0 : i32, i32
  }
  func.func @transform_8(%arg0: i32) -> (i32, i32) {
    %c0_i32 = arith.constant 0 : i32
    %c0_i32_0 = arith.constant 0 : i32
    %c0_i32_1 = arith.constant 0 : i32
    return %c0_i32, %c0_i32_0 : i32, i32
  }
  func.func @transform_9(%arg0: i32) -> (i32, i32) {
    %c0_i32 = arith.constant 0 : i32
    %c0_i32_0 = arith.constant 0 : i32
    return %arg0, %c0_i32 : i32, i32
  }
}

</mosaic_0001>

<llo_original>
// kernel: tpu_custom_call.1
$region0: #{tpu_custom_call.1}
  #allocation0 [shape = 'u32[]', space=smem, size = 0x4, offset = 0x4, fixed_abs, tag = 'smem constant byte address 0x4 - core index']
  #allocation1 [shape = 'u32[144,128]{1,0:T(1,128)}', space=vmem, size = 0x12000, scoped, tag = 'internal scratch']
  #allocation2 [shape = 'f32[16,128]{1,0:T(8,128)}', space=vmem, size = 0x2000, scoped, tag = 'scratch operand']
  %s0 = inlined_call_operand.hbm [shape: f32[16,16], index: 0, kind: input, shape index: {}]
  %s1 = inlined_call_operand.vmem [shape: f32[16,8], index: 1, kind: input, shape index: {}]
  %s2 = inlined_call_operand.vmem [shape: bf16[16,384], index: 2, kind: input, shape index: {}]
  %s3 = inlined_call_operand.vmem [shape: f32[1,384], index: 3, kind: input, shape index: {}]
  %s4 = inlined_call_operand.hbm [shape: f32[128,256], index: 4, kind: input, shape index: {}]
  %s5 = inlined_call_operand.vmem [shape: f32[1,256], index: 5, kind: input, shape index: {}]
  %s6 = inlined_call_operand.hbm [shape: bf16[128,384], index: 6, kind: input, shape index: {}]
  %s7 = inlined_call_operand.vmem [shape: f32[1,384], index: 7, kind: input, shape index: {}]
  %s8 = inlined_call_operand.hbm [shape: f32[256,128], index: 8, kind: input, shape index: {}]
  %s9 = inlined_call_operand.hbm [shape: f32[16,128], index: 9, kind: output, shape index: {}]
  %s10 = sld [smem:[#allocation0]]
  $region62: #{tpu_custom_call.1} parent=0
    _
  %s12 = ssub.s32 1, %s10
  %s13 = scalar_select 0, %s12, %s10
  $region1: #{tpu_custom_call.1} parent=0
    #allocation3 [shape = 'u8[8192]{0}', space=vmem, size = 0x2000, scoped, tag = 'input window, operand 0, single buffered']
    #allocation4 [shape = 's32[1]{0}', space=sflag, size = 0x4, scoped, tag = 'scoped memory for tpu_custom_call.1']
    #allocation5 [shape = 's32[1]{0}', space=sflag, size = 0x4, scoped, tag = 'scoped memory for tpu_custom_call.1']
    #allocation6 [shape = 'u8[131072]{0}', space=vmem, size = 0x20000, scoped, tag = 'input window, operand 4, single buffered']
    #allocation7 [shape = 's32[1]{0}', space=sflag, size = 0x4, scoped, tag = 'scoped memory for tpu_custom_call.1']
    #allocation8 [shape = 'u8[98304]{0}', space=vmem, size = 0x18000, scoped, tag = 'input window, operand 6, single buffered']
    #allocation9 [shape = 'u8[131072]{0}', space=vmem, size = 0x20000, scoped, tag = 'input window, operand 8, single buffered']
    #allocation10 [shape = 's32[1]{0}', space=sflag, size = 0x4, scoped, tag = 'scoped memory for tpu_custom_call.1']
    #allocation11 [shape = 'u8[8192]{0}', space=vmem, size = 0x2000, scoped, tag = 'output window, operand 0, single buffered']
    %14 = vsyncpa [#allocation4], 0
    %15 = vsyncpa [#allocation7], 0
    %16 = vsyncpa [#allocation10], 0
    %17 = vsyncpa [#allocation5], 0
    // Predicated region
    $region2: #{tpu_custom_call.1} parent=1 // pred_check
      _
    $region3: #{tpu_custom_call.1} parent=1 // pred_check_branch
      %19 = sbr.rel (0) target = $region5
    $region4: #{tpu_custom_call.1} parent=1 // pred_region
      %s21 = ssub.s32 256, 256
      %22 = vsyncadd [#allocation4], %s21
      %s23 = sshll.u32 [#allocation3], 4
      %s24 = int_to_ptr.vmem [resolvable:$true] %s23
      %29 = dma.hbm_to_vmem [thread:$0]  %s0, 256, %s24, [#allocation4], 128, 128, 8
    $region5: #{tpu_custom_call.1} parent=1 // pred_fallthru
      _
    // Predicated region
    $region6: #{tpu_custom_call.1} parent=1 // pred_check
      _
    $region7: #{tpu_custom_call.1} parent=1 // pred_check_branch
      %31 = sbr.rel (0) target = $region9
    $region8: #{tpu_custom_call.1} parent=1 // pred_region
      _
    $region9: #{tpu_custom_call.1} parent=1 // pred_fallthru
      _
    // Predicated region
    $region10: #{tpu_custom_call.1} parent=1 // pred_check
      _
    $region11: #{tpu_custom_call.1} parent=1 // pred_check_branch
      %33 = sbr.rel (0) target = $region13
    $region12: #{tpu_custom_call.1} parent=1 // pred_region
      _
    $region13: #{tpu_custom_call.1} parent=1 // pred_fallthru
      _
    // Predicated region
    $region14: #{tpu_custom_call.1} parent=1 // pred_check
      _
    $region15: #{tpu_custom_call.1} parent=1 // pred_check_branch
      %35 = sbr.rel (0) target = $region17
    $region16: #{tpu_custom_call.1} parent=1 // pred_region
      _
    $region17: #{tpu_custom_call.1} parent=1 // pred_fallthru
      _
    // Predicated region
    $region18: #{tpu_custom_call.1} parent=1 // pred_check
      _
    $region19: #{tpu_custom_call.1} parent=1 // pred_check_branch
      %37 = sbr.rel (0) target = $region21
    $region20: #{tpu_custom_call.1} parent=1 // pred_region
      %s39 = ssub.s32 4096, 4096
      %40 = vsyncadd [#allocation7], %s39
      %s41 = sshll.u32 [#allocation6], 4
      %s42 = int_to_ptr.vmem [resolvable:$true] %s41
      %47 = dma.hbm_to_vmem [thread:$0]  %s4, 4096, %s42, [#allocation7], 256, 256, 16
    $region21: #{tpu_custom_call.1} parent=1 // pred_fallthru
      _
    // Predicated region
    $region22: #{tpu_custom_call.1} parent=1 // pred_check
      _
    $region23: #{tpu_custom_call.1} parent=1 // pred_check_branch
      %49 = sbr.rel (0) target = $region25
    $region24: #{tpu_custom_call.1} parent=1 // pred_region
      _
    $region25: #{tpu_custom_call.1} parent=1 // pred_fallthru
      _
    // Predicated region
    $region26: #{tpu_custom_call.1} parent=1 // pred_check
      _
    $region27: #{tpu_custom_call.1} parent=1 // pred_check_branch
      %51 = sbr.rel (0) target = $region29
    $region28: #{tpu_custom_call.1} parent=1 // pred_region
      %s53 = ssub.s32 3072, 3072
      %54 = vsyncadd [#allocation7], %s53
      %s55 = sshll.u32 [#allocation8], 4
      %s56 = int_to_ptr.vmem [resolvable:$true] %s55
      %61 = dma.hbm_to_vmem [thread:$0]  %s6, 3072, %s56, [#allocation7], 192, 192, 12
    $region29: #{tpu_custom_call.1} parent=1 // pred_fallthru
      _
    // Predicated region
    $region30: #{tpu_custom_call.1} parent=1 // pred_check
      _
    $region31: #{tpu_custom_call.1} parent=1 // pred_check_branch
      %63 = sbr.rel (0) target = $region33
    $region32: #{tpu_custom_call.1} parent=1 // pred_region
      _
    $region33: #{tpu_custom_call.1} parent=1 // pred_fallthru
      _
    // Predicated region
    $region34: #{tpu_custom_call.1} parent=1 // pred_check
      _
    $region35: #{tpu_custom_call.1} parent=1 // pred_check_branch
      %65 = sbr.rel (0) target = $region37
    $region36: #{tpu_custom_call.1} parent=1 // pred_region
      %s67 = ssub.s32 4096, 4096
      %68 = vsyncadd [#allocation10], %s67
      %s69 = sshll.u32 [#allocation9], 4
      %s70 = int_to_ptr.vmem [resolvable:$true] %s69
      %75 = dma.hbm_to_vmem [thread:$0]  %s8, 4096, %s70, [#allocation10], 128, 128, 8
    $region37: #{tpu_custom_call.1} parent=1 // pred_fallthru
      _
    // Predicated region
    $region38: #{tpu_custom_call.1} parent=1 // pred_check
      _
    $region39: #{tpu_custom_call.1} parent=1 // pred_check_branch
      %77 = sbr.rel (0) target = $region41
    $region40: #{tpu_custom_call.1} parent=1 // pred_region
      %78 = dma.done [#allocation4], 256
    $region41: #{tpu_custom_call.1} parent=1 // pred_fallthru
      _
    // Predicated region
    $region42: #{tpu_custom_call.1} parent=1 // pred_check
      _
    $region43: #{tpu_custom_call.1} parent=1 // pred_check_branch
      %80 = sbr.rel (0) target = $region45
    $region44: #{tpu_custom_call.1} parent=1 // pred_region
      %81 = dma.done [#allocation7], 4096
    $region45: #{tpu_custom_call.1} parent=1 // pred_fallthru
      _
    // Predicated region
    $region46: #{tpu_custom_call.1} parent=1 // pred_check
      _
    $region47: #{tpu_custom_call.1} parent=1 // pred_check_branch
      %83 = sbr.rel (0) target = $region49
    $region48: #{tpu_custom_call.1} parent=1 // pred_region
      %84 = dma.done [#allocation7], 3072
    $region49: #{tpu_custom_call.1} parent=1 // pred_fallthru
      _
    // Predicated region
    $region50: #{tpu_custom_call.1} parent=1 // pred_check
      _
    $region51: #{tpu_custom_call.1} parent=1 // pred_check_branch
      %86 = sbr.rel (0) target = $region53
    $region52: #{tpu_custom_call.1} parent=1 // pred_region
      %87 = dma.done [#allocation10], 4096
    $region53: #{tpu_custom_call.1} parent=1 // pred_fallthru
      _
    %v89 = vld [vmem:[#allocation3] sm:$0xff]
    %v90 = vld [vmem:[#allocation3 + $0x8] sm:$0xff]
    %v91 = vpack.c.bf16 %v90, %v89
    %v92 = vld [vmem:[%s2] sm:$0xff]
    %v93 = vld [vmem:[%s2 + $0x8] sm:$0xf]
    %v94 = vld [vmem:[%s2 + $0xc] sm:$0xff]
    %v95 = vld [vmem:[%s2 + $0x14] sm:$0xf]
    %v96 = vld [vmem:[%s3] sm:$0x7]
    %v98 = vlaneseq
    %v99 = vshrl.u32 %v98, 7
    %v100 = vsub.s32 0, %v99
    %v101 = vrot.slane %v96, %v100
    %v102 = vlaneseq
    %v103 = vshrl.u32 %v102, 7
    %v104 = vsub.s32 1, %v103
    %v105 = vrot.slane %v96, %v104
    %v106 = vlaneseq
    %v107 = vshrl.u32 %v106, 7
    %v108 = vsub.s32 2, %v107
    %v109 = vrot.slane %v96, %v108
    %v117 = vunpack.c.l.b16 %v92
    %v118 = vunpack.c.h.b16 %v92
    %v119 = vunpack.c.l.b16 %v93
    %v120 = vunpack.c.l.b16 %v94
    %v121 = vunpack.c.h.b16 %v94
    %v122 = vunpack.c.l.b16 %v95
    %v123 = vpack.c.b16 %v120, %v117
    %v124 = vpack.c.b16 %v121, %v118
    %v125 = vpack.c.b16 %v122, %v119
    %vm129 = vcmask 130048
    %v131 = vsel %vm129, %v91, 0
    %133 = vmatprep.subr.bf16.mxu0 0
    %134 = vmatpush1.bf16.msra.mxu0 0
    %135 = vmatprep.subr.bf16.mxu0 0
    %136 = vmatpush1.bf16.msra.mxu0 0
    %137 = vmatprep.subr.bf16.mxu0 0
    %138 = vmatpush1.bf16.msra.mxu0 0
    %139 = vmatprep.subr.bf16.mxu0 0
    %140 = vmatpush1.bf16.msra.mxu0 0
    %141 = vmatprep.subr.bf16.mxu0 0
    %142 = vmatpush1.bf16.msra.mxu0 0
    %143 = vmatprep.subr.bf16.mxu0 0
    %144 = vmatpush1.bf16.msra.mxu0 0
    %145 = vmatprep.subr.bf16.mxu0 0
    %146 = vmatpush1.bf16.msra.mxu0 0
    %147 = vmatprep.subr.bf16.mxu0 %v124
    %148 = vmatpush1.bf16.msra.mxu0 %v123
    %149 = vmatprep.subr.bf16.mxu0 0
    %150 = vmatpush2.bf16.msra.mxu0 0
    %151 = vmatprep.subr.bf16.mxu0 0
    %152 = vmatpush2.bf16.msra.mxu0 0
    %153 = vmatprep.subr.bf16.mxu0 0
    %154 = vmatpush2.bf16.msra.mxu0 0
    %155 = vmatprep.subr.bf16.mxu0 0
    %156 = vmatpush2.bf16.msra.mxu0 0
    %157 = vmatprep.subr.bf16.mxu0 0
    %158 = vmatpush2.bf16.msra.mxu0 0
    %159 = vmatprep.subr.bf16.mxu0 0
    %160 = vmatpush2.bf16.msra.mxu0 0
    %161 = vmatprep.subr.bf16.mxu0 0
    %162 = vmatpush2.bf16.msra.mxu0 0
    %163 = vmatprep.subr.bf16.mxu0 0
    %164 = vmatpush2.bf16.msra.mxu0 0
    %165 = vmatprep.mubr.bf16.mxu0 0
    %166 = vmatmul.mubr.bf16.gmra.mxu0 %v131
    %v167 = vpop.f32.mrf.mxu0
    %v168 = vadd.f32 %v101, %v167
    %v169 = vpop.f32.mrf.mxu0
    %v170 = vadd.f32 %v105, %v169
    %v171 = vpop.f32.mrf.mxu0
    %v172 = vadd.f32 %v101, %v171
    %v173 = vpop.f32.mrf.mxu0
    %v174 = vadd.f32 %v105, %v173
    %175 = vdwg.mxu0
    %176 = vmatprep.subr.bf16.mxu0 0
    %177 = vmatpush1.bf16.msra.mxu0 0
    %178 = vmatprep.subr.bf16.mxu0 0
    %179 = vmatpush1.bf16.msra.mxu0 0
    %180 = vmatprep.subr.bf16.mxu0 0
    %181 = vmatpush1.bf16.msra.mxu0 0
    %182 = vmatprep.subr.bf16.mxu0 0
    %183 = vmatpush1.bf16.msra.mxu0 0
    %184 = vmatprep.subr.bf16.mxu0 0
    %185 = vmatpush1.bf16.msra.mxu0 0
    %186 = vmatprep.subr.bf16.mxu0 0
    %187 = vmatpush1.bf16.msra.mxu0 0
    %188 = vmatprep.subr.bf16.mxu0 0
    %189 = vmatpush1.bf16.msra.mxu0 0
    %190 = vmatprep.subr.bf16.mxu0 0
    %191 = vmatpush1.bf16.msra.mxu0 %v125
    %192 = vmatprep.subr.bf16.mxu0 0
    %193 = vmatpush2.bf16.msra.mxu0 0
    %194 = vmatprep.subr.bf16.mxu0 0
    %195 = vmatpush2.bf16.msra.mxu0 0
    %196 = vmatprep.subr.bf16.mxu0 0
    %197 = vmatpush2.bf16.msra.mxu0 0
    %198 = vmatprep.subr.bf16.mxu0 0
    %199 = vmatpush2.bf16.msra.mxu0 0
    %200 = vmatprep.subr.bf16.mxu0 0
    %201 = vmatpush2.bf16.msra.mxu0 0
    %202 = vmatprep.subr.bf16.mxu0 0
    %203 = vmatpush2.bf16.msra.mxu0 0
    %204 = vmatprep.subr.bf16.mxu0 0
    %205 = vmatpush2.bf16.msra.mxu0 0
    %206 = vmatprep.subr.bf16.mxu0 0
    %207 = vmatpush2.bf16.msra.mxu0 0
    %208 = vmatprep.mubr.bf16.mxu0 0
    %209 = vmatmul.mubr.bf16.gmra.mxu0 %v131
    %v210 = vpop.f32.mrf.mxu0
    %v211 = vadd.f32 %v109, %v210
    %v212 = vpop.f32.mrf.mxu0
    %v213 = vpop.f32.mrf.mxu0
    %v214 = vadd.f32 %v109, %v213
    %v215 = vpop.f32.mrf.mxu0
    %216 = vdwg.mxu0
    %v217 = vmul.f32 %v168, 0.5
    %v218 = vmul.f32 %v172, 0.5
    %v219 = vtanh.pop %v217
    %v220 = vtanh.pop %v218
    %v221 = vmul.f32 %v219, 0.5
    %v222 = vmul.f32 %v220, 0.5
    %v223 = vadd.f32 %v221, 0.5
    %v224 = vadd.f32 %v222, 0.5
    %v225 = vtanh.pop %v170
    %v226 = vtanh.pop %v174
    %v227 = vmul.f32 %v211, 0.5
    %v228 = vmul.f32 %v214, 0.5
    %v229 = vtanh.pop %v227
    %v230 = vtanh.pop %v228
    %v231 = vmul.f32 %v229, 0.5
    %v232 = vmul.f32 %v230, 0.5
    %v233 = vadd.f32 %v231, 0.5
    %v234 = vadd.f32 %v232, 0.5
    %v235 = vmul.f32 %v223, %v225
    %v236 = vmul.f32 %v224, %v226
    %v237 = vtanh.pop %v235
    %v238 = vtanh.pop %v236
    %v239 = vmul.f32 %v233, %v237
    %v240 = vmul.f32 %v234, %v238
    %v241 = vld [vmem:[#allocation6] sm:$0xff]
    %v242 = vld [vmem:[#allocation6 + $0x8] sm:$0xff]
    %v243 = vld [vmem:[#allocation6 + $0x10] sm:$0xff]
    %v244 = vld [vmem:[#allocation6 + $0x18] sm:$0xff]
    %v245 = vld [vmem:[#allocation6 + $0x20] sm:$0xff]
    %v246 = vld [vmem:[#allocation6 + $0x28] sm:$0xff]
    %v247 = vld [vmem:[#allocation6 + $0x30] sm:$0xff]
    %v248 = vld [vmem:[#allocation6 + $0x38] sm:$0xff]
    %v249 = vld [vmem:[#allocation6 + $0x40] sm:$0xff]
    %v250 = vld [vmem:[#allocation6 + $0x48] sm:$0xff]
    %v251 = vld [vmem:[#allocation6 + $0x50] sm:$0xff]
    %v252 = vld [vmem:[#allocation6 + $0x58] sm:$0xff]
    %v253 = vld [vmem:[#allocation6 + $0x60] sm:$0xff]
    %v254 = vld [vmem:[#allocation6 + $0x68] sm:$0xff]
    %v255 = vld [vmem:[#allocation6 + $0x70] sm:$0xff]
    %v256 = vld [vmem:[#allocation6 + $0x78] sm:$0xff]
    %v257 = vld [vmem:[#allocation6 + $0x80] sm:$0xff]
    %v258 = vld [vmem:[#allocation6 + $0x88] sm:$0xff]
    %v259 = vld [vmem:[#allocation6 + $0x90] sm:$0xff]
    %v260 = vld [vmem:[#allocation6 + $0x98] sm:$0xff]
    %v261 = vld [vmem:[#allocation6 + $0xa0] sm:$0xff]
    %v262 = vld [vmem:[#allocation6 + $0xa8] sm:$0xff]
    %v263 = vld [vmem:[#allocation6 + $0xb0] sm:$0xff]
    %v264 = vld [vmem:[#allocation6 + $0xb8] sm:$0xff]
    %v265 = vld [vmem:[#allocation6 + $0xc0] sm:$0xff]
    %v266 = vld [vmem:[#allocation6 + $0xc8] sm:$0xff]
    %v267 = vld [vmem:[#allocation6 + $0xd0] sm:$0xff]
    %v268 = vld [vmem:[#allocation6 + $0xd8] sm:$0xff]
    %v269 = vld [vmem:[#allocation6 + $0xe0] sm:$0xff]
    %v270 = vld [vmem:[#allocation6 + $0xe8] sm:$0xff]
    %v271 = vld [vmem:[#allocation6 + $0xf0] sm:$0xff]
    %v272 = vld [vmem:[#allocation6 + $0xf8] sm:$0xff]
    %v273 = vld [vmem:[%s5] sm:$0x3]
    %v275 = vlaneseq
    %v276 = vshrl.u32 %v275, 7
    %v277 = vsub.s32 0, %v276
    %v278 = vrot.slane %v273, %v277
    %v279 = vlaneseq
    %v280 = vshrl.u32 %v279, 7
    %v281 = vsub.s32 1, %v280
    %v282 = vrot.slane %v273, %v281
    %285 = vmatprep.subr.mxu0 %v272
    %286 = vmatpush1.msra.mxu0 %v271
    %287 = vmatprep.subr.mxu0 %v270
    %288 = vmatpush1.msra.mxu0 %v269
    %289 = vmatprep.subr.mxu0 %v268
    %290 = vmatpush1.msra.mxu0 %v267
    %291 = vmatprep.subr.mxu0 %v266
    %292 = vmatpush1.msra.mxu0 %v265
    %293 = vmatprep.subr.mxu0 %v264
    %294 = vmatpush1.msra.mxu0 %v263
    %295 = vmatprep.subr.mxu0 %v262
    %296 = vmatpush1.msra.mxu0 %v261
    %297 = vmatprep.subr.mxu0 %v260
    %298 = vmatpush1.msra.mxu0 %v259
    %299 = vmatprep.subr.mxu0 %v258
    %300 = vmatpush1.msra.mxu0 %v257
    %301 = vmatprep.subr.mxu0 %v256
    %302 = vmatpush1.msra.mxu0 %v255
    %303 = vmatprep.subr.mxu0 %v254
    %304 = vmatpush1.msra.mxu0 %v253
    %305 = vmatprep.subr.mxu0 %v252
    %306 = vmatpush1.msra.mxu0 %v251
    %307 = vmatprep.subr.mxu0 %v250
    %308 = vmatpush1.msra.mxu0 %v249
    %309 = vmatprep.subr.mxu0 %v248
    %310 = vmatpush1.msra.mxu0 %v247
    %311 = vmatprep.subr.mxu0 %v246
    %312 = vmatpush1.msra.mxu0 %v245
    %313 = vmatprep.subr.mxu0 %v244
    %314 = vmatpush1.msra.mxu0 %v243
    %315 = vmatprep.subr.mxu0 %v242
    %316 = vmatpush1.msra.mxu0 %v241
    %317 = vmatprep.subr.mxu0 0.0
    %318 = vmatpush2.msra.mxu0 0.0
    %319 = vmatprep.subr.mxu0 0.0
    %320 = vmatpush2.msra.mxu0 0.0
    %321 = vmatprep.subr.mxu0 0.0
    %322 = vmatpush2.msra.mxu0 0.0
    %323 = vmatprep.subr.mxu0 0.0
    %324 = vmatpush2.msra.mxu0 0.0
    %325 = vmatprep.subr.mxu0 0.0
    %326 = vmatpush2.msra.mxu0 0.0
    %327 = vmatprep.subr.mxu0 0.0
    %328 = vmatpush2.msra.mxu0 0.0
    %329 = vmatprep.subr.mxu0 0.0
    %330 = vmatpush2.msra.mxu0 0.0
    %331 = vmatprep.subr.mxu0 0.0
    %332 = vmatpush2.msra.mxu0 0.0
    %333 = vmatprep.subr.mxu0 0.0
    %334 = vmatpush2.msra.mxu0 0.0
    %335 = vmatprep.subr.mxu0 0.0
    %336 = vmatpush2.msra.mxu0 0.0
    %337 = vmatprep.subr.mxu0 0.0
    %338 = vmatpush2.msra.mxu0 0.0
    %339 = vmatprep.subr.mxu0 0.0
    %340 = vmatpush2.msra.mxu0 0.0
    %341 = vmatprep.subr.mxu0 0.0
    %342 = vmatpush2.msra.mxu0 0.0
    %343 = vmatprep.subr.mxu0 0.0
    %344 = vmatpush2.msra.mxu0 0.0
    %345 = vmatprep.subr.mxu0 0.0
    %346 = vmatpush2.msra.mxu0 0.0
    %347 = vmatprep.subr.mxu0 0.0
    %348 = vmatpush2.msra.mxu0 0.0
    %349 = vmatprep.mubr.f32.mxu0 0.0
    %350 = vmatmul.mubr.f32.gmra.mxu0 %v239
    %v351 = vpop.f32.mrf.mxu0
    %v352 = vadd.f32 %v278, %v351
    %v353 = vpop.f32.mrf.mxu0
    %v354 = vadd.f32 %v282, %v353
    %355 = vmatprep.mubr.f32.mxu0 0.0
    %356 = vmatmul.mubr.f32.gmra.mxu0 %v240
    %v357 = vpop.f32.mrf.mxu0
    %v358 = vadd.f32 %v278, %v357
    %v359 = vpop.f32.mrf.mxu0
    %v360 = vadd.f32 %v282, %v359
    %361 = vdwg.mxu0
    %362 = vst [vmem:[#allocation2] sm:$0xff] 0.0
    %363 = vst [vmem:[#allocation2 + $0x8] sm:$0xff] 0.0
    %v364 = vld [vmem:[%s1] sm:$0xff]
    %v365 = vld [vmem:[%s1 + $0x8] sm:$0xff]
    %vm366 = vcmask 64512
    %367 = vst.msk [vmem:[#allocation2] sm:$0xff] %vm366, %v364
    %368 = vst.msk [vmem:[#allocation2 + $0x8] sm:$0xff] %vm366, %v365
    %v369 = vld [vmem:[#allocation2] sm:$0xff]
    %v370 = vld [vmem:[#allocation2 + $0x8] sm:$0xff]
    %v371 = vmul.f32 %v354, 0.5
    %v372 = vmul.f32 %v360, 0.5
    %v373 = vmul.f32 %v371, 1.442695
    %v374 = vpow.pop %v373
    %v375 = vmul.f32 %v372, 1.442695
    %v376 = vpow.pop %v375
    %v377 = vmul.f32 %v369, %v374
    %v378 = vmul.f32 %v370, %v376
    %v379 = vadd.f32 %v352, %v377
    %v380 = vadd.f32 %v358, %v378
    %v381 = vpack.c.bf16 %v380, %v379
    %v382 = vld [vmem:[#allocation8] sm:$0xff]
    %v383 = vld [vmem:[#allocation8 + $0x8] sm:$0xf]
    %v384 = vld [vmem:[#allocation8 + $0xc] sm:$0xff]
    %v385 = vld [vmem:[#allocation8 + $0x14] sm:$0xf]
    %v386 = vld [vmem:[#allocation8 + $0x18] sm:$0xff]
    %v387 = vld [vmem:[#allocation8 + $0x20] sm:$0xf]
    %v388 = vld [vmem:[#allocation8 + $0x24] sm:$0xff]
    %v389 = vld [vmem:[#allocation8 + $0x2c] sm:$0xf]
    %v390 = vld [vmem:[#allocation8 + $0x30] sm:$0xff]
    %v391 = vld [vmem:[#allocation8 + $0x38] sm:$0xf]
    %v392 = vld [vmem:[#allocation8 + $0x3c] sm:$0xff]
    %v393 = vld [vmem:[#allocation8 + $0x44] sm:$0xf]
    %v394 = vld [vmem:[#allocation8 + $0x48] sm:$0xff]
    %v395 = vld [vmem:[#allocation8 + $0x50] sm:$0xf]
    %v396 = vld [vmem:[#allocation8 + $0x54] sm:$0xff]
    %v397 = vld [vmem:[#allocation8 + $0x5c] sm:$0xf]
    %v398 = vld [vmem:[#allocation8 + $0x60] sm:$0xff]
    %v399 = vld [vmem:[#allocation8 + $0x68] sm:$0xf]
    %v400 = vld [vmem:[#allocation8 + $0x6c] sm:$0xff]
    %v401 = vld [vmem:[#allocation8 + $0x74] sm:$0xf]
    %v402 = vld [vmem:[#allocation8 + $0x78] sm:$0xff]
    %v403 = vld [vmem:[#allocation8 + $0x80] sm:$0xf]
    %v404 = vld [vmem:[#allocation8 + $0x84] sm:$0xff]
    %v405 = vld [vmem:[#allocation8 + $0x8c] sm:$0xf]
    %v406 = vld [vmem:[#allocation8 + $0x90] sm:$0xff]
    %v407 = vld [vmem:[#allocation8 + $0x98] sm:$0xf]
    %v408 = vld [vmem:[#allocation8 + $0x9c] sm:$0xff]
    %v409 = vld [vmem:[#allocation8 + $0xa4] sm:$0xf]
    %v410 = vld [vmem:[#allocation8 + $0xa8] sm:$0xff]
    %v411 = vld [vmem:[#allocation8 + $0xb0] sm:$0xf]
    %v412 = vld [vmem:[#allocation8 + $0xb4] sm:$0xff]
    %v413 = vld [vmem:[#allocation8 + $0xbc] sm:$0xf]
    %v414 = vld [vmem:[%s7] sm:$0x7]
    %v416 = vlaneseq
    %v417 = vshrl.u32 %v416, 7
    %v418 = vsub.s32 0, %v417
    %v419 = vrot.slane %v414, %v418
    %v420 = vlaneseq
    %v421 = vshrl.u32 %v420, 7
    %v422 = vsub.s32 1, %v421
    %v423 = vrot.slane %v414, %v422
    %v424 = vlaneseq
    %v425 = vshrl.u32 %v424, 7
    %v426 = vsub.s32 2, %v425
    %v427 = vrot.slane %v414, %v426
    %v463 = vunpack.c.l.b16 %v382
    %v464 = vunpack.c.h.b16 %v382
    %v465 = vunpack.c.l.b16 %v383
    %v466 = vunpack.c.l.b16 %v384
    %v467 = vunpack.c.h.b16 %v384
    %v468 = vunpack.c.l.b16 %v385
    %v469 = vunpack.c.l.b16 %v386
    %v470 = vunpack.c.h.b16 %v386
    %v471 = vunpack.c.l.b16 %v387
    %v472 = vunpack.c.l.b16 %v388
    %v473 = vunpack.c.h.b16 %v388
    %v474 = vunpack.c.l.b16 %v389
    %v475 = vunpack.c.l.b16 %v390
    %v476 = vunpack.c.h.b16 %v390
    %v477 = vunpack.c.l.b16 %v391
    %v478 = vunpack.c.l.b16 %v392
    %v479 = vunpack.c.h.b16 %v392
    %v480 = vunpack.c.l.b16 %v393
    %v481 = vunpack.c.l.b16 %v394
    %v482 = vunpack.c.h.b16 %v394
    %v483 = vunpack.c.l.b16 %v395
    %v484 = vunpack.c.l.b16 %v396
    %v485 = vunpack.c.h.b16 %v396
    %v486 = vunpack.c.l.b16 %v397
    %v487 = vunpack.c.l.b16 %v398
    %v488 = vunpack.c.h.b16 %v398
    %v489 = vunpack.c.l.b16 %v399
    %v490 = vunpack.c.l.b16 %v400
    %v491 = vunpack.c.h.b16 %v400
    %v492 = vunpack.c.l.b16 %v401
    %v493 = vunpack.c.l.b16 %v402
    %v494 = vunpack.c.h.b16 %v402
    %v495 = vunpack.c.l.b16 %v403
    %v496 = vunpack.c.l.b16 %v404
    %v497 = vunpack.c.h.b16 %v404
    %v498 = vunpack.c.l.b16 %v405
    %v499 = vunpack.c.l.b16 %v406
    %v500 = vunpack.c.h.b16 %v406
    %v501 = vunpack.c.l.b16 %v407
    %v502 = vunpack.c.l.b16 %v408
    %v503 = vunpack.c.h.b16 %v408
    %v504 = vunpack.c.l.b16 %v409
    %v505 = vunpack.c.l.b16 %v410
    %v506 = vunpack.c.h.b16 %v410
    %v507 = vunpack.c.l.b16 %v411
    %v508 = vunpack.c.l.b16 %v412
    %v509 = vunpack.c.h.b16 %v412
    %v510 = vunpack.c.l.b16 %v413
    %v511 = vpack.c.b16 %v466, %v463
    %v512 = vpack.c.b16 %v467, %v464
    %v513 = vpack.c.b16 %v468, %v465
    %v514 = vpack.c.b16 %v472, %v469
    %v515 = vpack.c.b16 %v473, %v470
    %v516 = vpack.c.b16 %v474, %v471
    %v517 = vpack.c.b16 %v478, %v475
    %v518 = vpack.c.b16 %v479, %v476
    %v519 = vpack.c.b16 %v480, %v477
    %v520 = vpack.c.b16 %v484, %v481
    %v521 = vpack.c.b16 %v485, %v482
    %v522 = vpack.c.b16 %v486, %v483
    %v523 = vpack.c.b16 %v490, %v487
    %v524 = vpack.c.b16 %v491, %v488
    %v525 = vpack.c.b16 %v492, %v489
    %v526 = vpack.c.b16 %v496, %v493
    %v527 = vpack.c.b16 %v497, %v494
    %v528 = vpack.c.b16 %v498, %v495
    %v529 = vpack.c.b16 %v502, %v499
    %v530 = vpack.c.b16 %v503, %v500
    %v531 = vpack.c.b16 %v504, %v501
    %v532 = vpack.c.b16 %v508, %v505
    %v533 = vpack.c.b16 %v509, %v506
    %v534 = vpack.c.b16 %v510, %v507
    %559 = vmatprep.subr.bf16.mxu0 %v533
    %560 = vmatpush1.bf16.msra.mxu0 %v532
    %561 = vmatprep.subr.bf16.mxu0 %v530
    %562 = vmatpush1.bf16.msra.mxu0 %v529
    %563 = vmatprep.subr.bf16.mxu0 %v527
    %564 = vmatpush1.bf16.msra.mxu0 %v526
    %565 = vmatprep.subr.bf16.mxu0 %v524
    %566 = vmatpush1.bf16.msra.mxu0 %v523
    %567 = vmatprep.subr.bf16.mxu0 %v521
    %568 = vmatpush1.bf16.msra.mxu0 %v520
    %569 = vmatprep.subr.bf16.mxu0 %v518
    %570 = vmatpush1.bf16.msra.mxu0 %v517
    %571 = vmatprep.subr.bf16.mxu0 %v515
    %572 = vmatpush1.bf16.msra.mxu0 %v514
    %573 = vmatprep.subr.bf16.mxu0 %v512
    %574 = vmatpush1.bf16.msra.mxu0 %v511
    %575 = vmatprep.subr.bf16.mxu0 0
    %576 = vmatpush2.bf16.msra.mxu0 0
    %577 = vmatprep.subr.bf16.mxu0 0
    %578 = vmatpush2.bf16.msra.mxu0 0
    %579 = vmatprep.subr.bf16.mxu0 0
    %580 = vmatpush2.bf16.msra.mxu0 0
    %581 = vmatprep.subr.bf16.mxu0 0
    %582 = vmatpush2.bf16.msra.mxu0 0
    %583 = vmatprep.subr.bf16.mxu0 0
    %584 = vmatpush2.bf16.msra.mxu0 0
    %585 = vmatprep.subr.bf16.mxu0 0
    %586 = vmatpush2.bf16.msra.mxu0 0
    %587 = vmatprep.subr.bf16.mxu0 0
    %588 = vmatpush2.bf16.msra.mxu0 0
    %589 = vmatprep.subr.bf16.mxu0 0
    %590 = vmatpush2.bf16.msra.mxu0 0
    %591 = vmatprep.mubr.bf16.mxu0 0
    %592 = vmatmul.mubr.bf16.gmra.mxu0 %v381
    %v593 = vpop.f32.mrf.mxu0
    %v594 = vadd.f32 %v419, %v593
    %v595 = vpop.f32.mrf.mxu0
    %v596 = vadd.f32 %v423, %v595
    %v597 = vpop.f32.mrf.mxu0
    %v598 = vadd.f32 %v419, %v597
    %v599 = vpop.f32.mrf.mxu0
    %v600 = vadd.f32 %v423, %v599
    %601 = vdwg.mxu0
    %602 = vmatprep.subr.bf16.mxu0 0
    %603 = vmatpush1.bf16.msra.mxu0 %v534
    %604 = vmatprep.subr.bf16.mxu0 0
    %605 = vmatpush1.bf16.msra.mxu0 %v531
    %606 = vmatprep.subr.bf16.mxu0 0
    %607 = vmatpush1.bf16.msra.mxu0 %v528
    %608 = vmatprep.subr.bf16.mxu0 0
    %609 = vmatpush1.bf16.msra.mxu0 %v525
    %610 = vmatprep.subr.bf16.mxu0 0
    %611 = vmatpush1.bf16.msra.mxu0 %v522
    %612 = vmatprep.subr.bf16.mxu0 0
    %613 = vmatpush1.bf16.msra.mxu0 %v519
    %614 = vmatprep.subr.bf16.mxu0 0
    %615 = vmatpush1.bf16.msra.mxu0 %v516
    %616 = vmatprep.subr.bf16.mxu0 0
    %617 = vmatpush1.bf16.msra.mxu0 %v513
    %618 = vmatprep.subr.bf16.mxu0 0
    %619 = vmatpush2.bf16.msra.mxu0 0
    %620 = vmatprep.subr.bf16.mxu0 0
    %621 = vmatpush2.bf16.msra.mxu0 0
    %622 = vmatprep.subr.bf16.mxu0 0
    %623 = vmatpush2.bf16.msra.mxu0 0
    %624 = vmatprep.subr.bf16.mxu0 0
    %625 = vmatpush2.bf16.msra.mxu0 0
    %626 = vmatprep.subr.bf16.mxu0 0
    %627 = vmatpush2.bf16.msra.mxu0 0
    %628 = vmatprep.subr.bf16.mxu0 0
    %629 = vmatpush2.bf16.msra.mxu0 0
    %630 = vmatprep.subr.bf16.mxu0 0
    %631 = vmatpush2.bf16.msra.mxu0 0
    %632 = vmatprep.subr.bf16.mxu0 0
    %633 = vmatpush2.bf16.msra.mxu0 0
    %634 = vmatprep.mubr.bf16.mxu0 0
    %635 = vmatmul.mubr.bf16.gmra.mxu0 %v381
    %v636 = vpop.f32.mrf.mxu0
    %v637 = vadd.f32 %v427, %v636
    %v638 = vpop.f32.mrf.mxu0
    %v639 = vpop.f32.mrf.mxu0
    %v640 = vadd.f32 %v427, %v639
    %v641 = vpop.f32.mrf.mxu0
    %642 = vdwg.mxu0
    %v643 = vmul.f32 %v594, 0.5
    %v644 = vmul.f32 %v598, 0.5
    %v645 = vtanh.pop %v643
    %v646 = vtanh.pop %v644
    %v647 = vmul.f32 %v645, 0.5
    %v648 = vmul.f32 %v646, 0.5
    %v649 = vadd.f32 %v647, 0.5
    %v650 = vadd.f32 %v648, 0.5
    %v651 = vtanh.pop %v596
    %v652 = vtanh.pop %v600
    %v653 = vmul.f32 %v637, 0.5
    %v654 = vmul.f32 %v640, 0.5
    %v655 = vtanh.pop %v653
    %v656 = vtanh.pop %v654
    %v657 = vmul.f32 %v655, 0.5
    %v658 = vmul.f32 %v656, 0.5
    %v659 = vadd.f32 %v657, 0.5
    %v660 = vadd.f32 %v658, 0.5
    %v661 = vmul.f32 %v649, %v651
    %v662 = vmul.f32 %v650, %v652
    %v663 = vtanh.pop %v661
    %v664 = vtanh.pop %v662
    %v665 = vmul.f32 %v659, %v663
    %v666 = vmul.f32 %v660, %v664
    %v667 = vld [vmem:[#allocation9] sm:$0xff]
    %v668 = vld [vmem:[#allocation9 + $0x8] sm:$0xff]
    %v669 = vld [vmem:[#allocation9 + $0x10] sm:$0xff]
    %v670 = vld [vmem:[#allocation9 + $0x18] sm:$0xff]
    %v671 = vld [vmem:[#allocation9 + $0x20] sm:$0xff]
    %v672 = vld [vmem:[#allocation9 + $0x28] sm:$0xff]
    %v673 = vld [vmem:[#allocation9 + $0x30] sm:$0xff]
    %v674 = vld [vmem:[#allocation9 + $0x38] sm:$0xff]
    %v675 = vld [vmem:[#allocation9 + $0x40] sm:$0xff]
    %v676 = vld [vmem:[#allocation9 + $0x48] sm:$0xff]
    %v677 = vld [vmem:[#allocation9 + $0x50] sm:$0xff]
    %v678 = vld [vmem:[#allocation9 + $0x58] sm:$0xff]
    %v679 = vld [vmem:[#allocation9 + $0x60] sm:$0xff]
    %v680 = vld [vmem:[#allocation9 + $0x68] sm:$0xff]
    %v681 = vld [vmem:[#allocation9 + $0x70] sm:$0xff]
    %v682 = vld [vmem:[#allocation9 + $0x78] sm:$0xff]
    %v683 = vld [vmem:[#allocation9 + $0x80] sm:$0xff]
    %v684 = vld [vmem:[#allocation9 + $0x88] sm:$0xff]
    %v685 = vld [vmem:[#allocation9 + $0x90] sm:$0xff]
    %v686 = vld [vmem:[#allocation9 + $0x98] sm:$0xff]
    %v687 = vld [vmem:[#allocation9 + $0xa0] sm:$0xff]
    %v688 = vld [vmem:[#allocation9 + $0xa8] sm:$0xff]
    %v689 = vld [vmem:[#allocation9 + $0xb0] sm:$0xff]
    %v690 = vld [vmem:[#allocation9 + $0xb8] sm:$0xff]
    %v691 = vld [vmem:[#allocation9 + $0xc0] sm:$0xff]
    %v692 = vld [vmem:[#allocation9 + $0xc8] sm:$0xff]
    %v693 = vld [vmem:[#allocation9 + $0xd0] sm:$0xff]
    %v694 = vld [vmem:[#allocation9 + $0xd8] sm:$0xff]
    %v695 = vld [vmem:[#allocation9 + $0xe0] sm:$0xff]
    %v696 = vld [vmem:[#allocation9 + $0xe8] sm:$0xff]
    %v697 = vld [vmem:[#allocation9 + $0xf0] sm:$0xff]
    %v698 = vld [vmem:[#allocation9 + $0xf8] sm:$0xff]
    %699 = vmatprep.subr.mxu0 0.0
    %700 = vmatpush1.msra.mxu0 %v682
    %701 = vmatprep.subr.mxu0 0.0
    %702 = vmatpush1.msra.mxu0 %v681
    %703 = vmatprep.subr.mxu0 0.0
    %704 = vmatpush1.msra.mxu0 %v680
    %705 = vmatprep.subr.mxu0 0.0
    %706 = vmatpush1.msra.mxu0 %v679
    %707 = vmatprep.subr.mxu0 0.0
    %708 = vmatpush1.msra.mxu0 %v678
    %709 = vmatprep.subr.mxu0 0.0
    %710 = vmatpush1.msra.mxu0 %v677
    %711 = vmatprep.subr.mxu0 0.0
    %712 = vmatpush1.msra.mxu0 %v676
    %713 = vmatprep.subr.mxu0 0.0
    %714 = vmatpush1.msra.mxu0 %v675
    %715 = vmatprep.subr.mxu0 0.0
    %716 = vmatpush1.msra.mxu0 %v674
    %717 = vmatprep.subr.mxu0 0.0
    %718 = vmatpush1.msra.mxu0 %v673
    %719 = vmatprep.subr.mxu0 0.0
    %720 = vmatpush1.msra.mxu0 %v672
    %721 = vmatprep.subr.mxu0 0.0
    %722 = vmatpush1.msra.mxu0 %v671
    %723 = vmatprep.subr.mxu0 0.0
    %724 = vmatpush1.msra.mxu0 %v670
    %725 = vmatprep.subr.mxu0 0.0
    %726 = vmatpush1.msra.mxu0 %v669
    %727 = vmatprep.subr.mxu0 0.0
    %728 = vmatpush1.msra.mxu0 %v668
    %729 = vmatprep.subr.mxu0 0.0
    %730 = vmatpush1.msra.mxu0 %v667
    %731 = vmatprep.subr.mxu0 0.0
    %732 = vmatpush2.msra.mxu0 %v698
    %733 = vmatprep.subr.mxu0 0.0
    %734 = vmatpush2.msra.mxu0 %v697
    %735 = vmatprep.subr.mxu0 0.0
    %736 = vmatpush2.msra.mxu0 %v696
    %737 = vmatprep.subr.mxu0 0.0
    %738 = vmatpush2.msra.mxu0 %v695
    %739 = vmatprep.subr.mxu0 0.0
    %740 = vmatpush2.msra.mxu0 %v694
    %741 = vmatprep.subr.mxu0 0.0
    %742 = vmatpush2.msra.mxu0 %v693
    %743 = vmatprep.subr.mxu0 0.0
    %744 = vmatpush2.msra.mxu0 %v692
    %745 = vmatprep.subr.mxu0 0.0
    %746 = vmatpush2.msra.mxu0 %v691
    %747 = vmatprep.subr.mxu0 0.0
    %748 = vmatpush2.msra.mxu0 %v690
    %749 = vmatprep.subr.mxu0 0.0
    %750 = vmatpush2.msra.mxu0 %v689
    %751 = vmatprep.subr.mxu0 0.0
    %752 = vmatpush2.msra.mxu0 %v688
    %753 = vmatprep.subr.mxu0 0.0
    %754 = vmatpush2.msra.mxu0 %v687
    %755 = vmatprep.subr.mxu0 0.0
    %756 = vmatpush2.msra.mxu0 %v686
    %757 = vmatprep.subr.mxu0 0.0
    %758 = vmatpush2.msra.mxu0 %v685
    %759 = vmatprep.subr.mxu0 0.0
    %760 = vmatpush2.msra.mxu0 %v684
    %761 = vmatprep.subr.mxu0 0.0
    %762 = vmatpush2.msra.mxu0 %v683
    %763 = vmatprep.mubr.f32.mxu0 %v354
    %764 = vmatmul.mubr.f32.gmra.mxu0 %v352
    %v765 = vpop.f32.mrf.mxu0
    %v766 = vadd.f32 0.0, %v765
    %v767 = vpop.f32.mrf.mxu0
    %768 = vmatprep.mubr.f32.mxu0 %v360
    %769 = vmatmul.mubr.f32.gmra.mxu0 %v358
    %v770 = vpop.f32.mrf.mxu0
    %v771 = vadd.f32 0.0, %v770
    %v772 = vpop.f32.mrf.mxu0
    %773 = vdwg.mxu0
    %v774 = vadd.f32 %v665, %v766
    %v775 = vadd.f32 %v666, %v771
    %776 = vst [vmem:[#allocation11] sm:$0xff] %v774
    %777 = vst [vmem:[#allocation11 + $0x8] sm:$0xff] %v775
    // Predicated region
    $region54: #{tpu_custom_call.1} parent=1 // pred_check
      _
    $region55: #{tpu_custom_call.1} parent=1 // pred_check_branch
      %779 = sbr.rel (0) target = $region57
    $region56: #{tpu_custom_call.1} parent=1 // pred_region
      %s781 = ssub.s32 256, 256
      %782 = vsyncadd [#allocation5], %s781
      %s783 = sshll.u32 [#allocation11], 4
      %s784 = int_to_ptr.vmem [resolvable:$true] %s783
      %789 = dma.vmem_to_hbm [thread:$0]  %s784, 256, %s9, [#allocation5], 128, 128, 8
    $region57: #{tpu_custom_call.1} parent=1 // pred_fallthru
      _
    // Predicated region
    $region58: #{tpu_custom_call.1} parent=1 // pred_check
      _
    $region59: #{tpu_custom_call.1} parent=1 // pred_check_branch
      %791 = sbr.rel (0) target = $region61
    $region60: #{tpu_custom_call.1} parent=1 // pred_region
      %792 = dma.done [#allocation5], 256
    $region61: #{tpu_custom_call.1} parent=1 // pred_fallthru
      _
    %793 = vsyncpa [#allocation4], 1
    %794 = vsyncpa [#allocation7], 1
    %795 = vsyncpa [#allocation10], 1
    %796 = vsyncpa [#allocation5], 1

</llo_original>
